<compile_context>
chip_gen: v6e
topology: v6e:2x2x1
jax: 0.10.0
libtpu: 0.0.40
codegen_flags: <defaults>
</compile_context>

<pallas_src>
import functools
import math

import jax
import jax.numpy as jnp
from jax.experimental import pallas as pl
from jax.experimental.pallas import tpu as pltpu


def _eca_kernel(band_ref, x_ref, o_ref, *, inv_hw, use_sigmoid, channels_last):
    # band_ref : VMEM (C, C) f32 -- banded Conv1d(1,1,k) weights (wrapper-built)
    # x_ref    : VMEM (nb, C, HW), or (nb, HW, C) if channels_last
    # o_ref    : same shape / dtype as x_ref
    #
    # NOTE: x_ref is deliberately read twice (pool, then rescale) so the whole
    # block value is never live across the pool -> conv -> gate chain.
    reduce_axis = 1 if channels_last else 2

    # Global average pool over the spatial axis, f32 accumulation.
    y = jnp.sum(x_ref[...], axis=reduce_axis, dtype=jnp.float32) * inv_hw  # (nb, C)

    # k-tap channel cross-correlation (zero padded) as a banded matmul (MXU).
    conv = jnp.dot(y, band_ref[...], preferred_element_type=jnp.float32)   # (nb, C)

    # Gate.
    if use_sigmoid:
        s = jax.nn.sigmoid(conv)                       # nn.Sigmoid()
    else:
        s = jnp.clip(conv + 3.0, 0.0, 6.0) * (1.0 / 6.0)   # h_sigmoid: ReLU6(x+3)/6
    s = s.astype(x_ref.dtype)                          # rescale in native dtype

    # Channel-wise rescale (second, independent read of the resident block).
    if channels_last:
        o_ref[...] = (x_ref[...] * s[:, None, :]).astype(o_ref.dtype)
    else:
        o_ref[...] = (x_ref[...] * s[:, :, None]).astype(o_ref.dtype)


def _vmem_capacity_bytes(default=64 * 1024 * 1024):
    try:
        cap = getattr(pltpu.get_tpu_info(), "vmem_capacity_bytes", None)
        if cap:
            return int(cap)
    except Exception:
        pass
    return default


def _num_tensorcores(default=1):
    try:
        n = getattr(pltpu.get_tpu_info(), "num_cores", None)
        if n:
            return int(n)
    except Exception:
        pass
    return default


def eca_forward(x, conv_w, *, use_sigmoid=True, target_block_bytes=None,
                vmem_limit_bytes=None, num_tensorcores=None):
    """ECALayer forward. x: (N, C, H, W); conv_w: (1, 1, k) Conv1d weight."""
    N, C, H, W = x.shape
    HW = H * W
    k = conv_w.shape[-1]
    assert k % 2 == 1, "ECA expects an odd kernel size (adaptive-k formula)"
    pad = k // 2
    itemsize = jnp.dtype(x.dtype).itemsize

    # Banded weight matrix: band[ci, co] = w[ci - co + pad] inside the band,
    # 0 outside (== Conv1d zero padding).  conv_out = y @ band.
    w = conv_w.reshape(k).astype(jnp.float32)
    ci = jnp.arange(C)[:, None]
    co = jnp.arange(C)[None, :]
    d = ci - co + pad
    band = jnp.where((d >= 0) & (d < k), w[jnp.clip(d, 0, k - 1)], 0.0)
    band = band.astype(jnp.float32)

    # Generation-aware VMEM budgets.
    vmem_cap = _vmem_capacity_bytes()
    if target_block_bytes is None:
        # ~8 MiB blocks on v7x (64 MiB VMEM), ~16 MiB on v5e/v6e (128 MiB).
        target_block_bytes = max(2 * 1024 * 1024, vmem_cap // 8)
    if num_tensorcores is None:
        num_tensorcores = _num_tensorcores()

    # Layout: keep the 128-lane axis densely used.  Large spatial maps keep
    # (N, C, HW); small spatial maps (HW < 128) go channels-last.  (The
    # wrapper transposes are plain XLA copies; in a fused model they typically
    # fuse with the producer/consumer.)
    channels_last = (HW < 128) and (C > HW)
    if channels_last:
        x2 = jnp.swapaxes(x.reshape(N, C, HW), -1, -2)   # (N, HW, C)
        tail = (HW, C)
    else:
        x2 = x.reshape(N, C, HW)                         # (N, C, HW)
        tail = (C, HW)

    # Batch block size: biggest block within budget; only force >= num_cores
    # grid steps when the chip actually has multiple TensorCores (v7x).
    per_sample = C * HW * itemsize
    nb = max(1, min(N, target_block_bytes // max(1, per_sample)))
    if num_tensorcores > 1 and N > 1:
        nb = min(nb, pl.cdiv(N, num_tensorcores))
    grid = (pl.cdiv(N, nb),)

    # VMEM limit: in + out double-buffered (4x block) + band + headroom,
    # clamped to physical capacity.
    if vmem_limit_bytes is None:
        vmem_limit_bytes = (5 * vmem_cap) // 8
    needed = 4 * nb * per_sample + 2 * band.size * 4 + (2 << 20)
    vmem_limit_bytes = int(min(vmem_cap, max(vmem_limit_bytes, needed)))

    kernel = functools.partial(_eca_kernel, inv_hw=1.0 / HW,
                               use_sigmoid=use_sigmoid,
                               channels_last=channels_last)

    cost = pl.CostEstimate(
        flops=int(2 * N * C * HW + 2 * N * C * C),
        transcendentals=int(N * C),
        bytes_accessed=int(2 * N * C * HW * itemsize + C * C * 4),
    )

    out = pl.pallas_call(
        kernel,
        out_shape=jax.ShapeDtypeStruct((N,) + tail, x.dtype),
        grid=grid,
        in_specs=[
            # band matrix: constant block index -> stays resident across steps
            pl.BlockSpec((C, C), lambda n: (0, 0)),
            # activation block: lane-dense last axis
            pl.BlockSpec((nb,) + tail, lambda n: (n, 0, 0)),
        ],
        out_specs=pl.BlockSpec((nb,) + tail, lambda n: (n, 0, 0)),
        compiler_params=pltpu.CompilerParams(
            dimension_semantics=("parallel",),
            vmem_limit_bytes=vmem_limit_bytes,
        ),
        cost_estimate=cost,
    )(band, x2)
    # NOTE: when N % nb != 0 the padded batch rows of the last block compute
    # garbage gates, but nothing reduces across the batch axis and the padded
    # output rows are discarded on writeback, so results stay correct.

    if channels_last:
        out = jnp.swapaxes(out, -1, -2)
    return out.reshape(N, C, H, W)


def eca_reference(x, conv_w, *, use_sigmoid=True):
    """Pure-JAX reference mirroring the PyTorch forward."""
    N, C, H, W = x.shape
    k = conv_w.shape[-1]
    pad = k // 2
    w = conv_w.reshape(k).astype(jnp.float32)
    y = jnp.mean(x.astype(jnp.float32), axis=(2, 3))            # (N, C)
    yp = jnp.pad(y, ((0, 0), (pad, pad)))
    conv = sum(w[j] * yp[:, j:j + C] for j in range(k))
    if use_sigmoid:
        s = jax.nn.sigmoid(conv)
    else:
        s = jnp.clip(conv + 3.0, 0.0, 6.0) / 6.0
    return (x.astype(jnp.float32) * s[:, :, None, None]).astype(x.dtype)


def _eca_k(channel, gamma=2, b=1):
    t = int(abs((math.log(channel, 2) + b) / gamma))
    return t if t % 2 else t + 1


if __name__ == "__main__":
    key = jax.random.PRNGKey(0)
    k1, k2, k3, k4 = jax.random.split(key, 4)

    # --- case 1: ECALayer(channel=16) -> k=3, 16x16 spatial (lane-dense HW) ---
    N, C, H, W = 2, 16, 16, 16
    k = _eca_k(C)                                                   # 3
    x = jax.random.normal(k1, (N, C, H, W), dtype=jnp.float32)
    conv_w = jax.random.normal(k2, (1, 1, k), dtype=jnp.float32) * 0.5

    out = jax.block_until_ready(eca_forward(x, conv_w))
    ref = eca_reference(x, conv_w)
    assert out.shape == x.shape and out.dtype == x.dtype
    # (the in-kernel conv runs on the MXU; default matmul precision rounds the
    #  tiny pooled operands to bf16, hence 2e-3 instead of 1e-5 tolerance)
    assert jnp.allclose(out, ref, atol=2e-3, rtol=2e-3), "mismatch (f32 / sigmoid)"

    out_h = jax.block_until_ready(eca_forward(x, conv_w, use_sigmoid=False))
    ref_h = eca_reference(x, conv_w, use_sigmoid=False)
    assert jnp.allclose(out_h, ref_h, atol=2e-3, rtol=2e-3), "mismatch (h_sigmoid)"

    # bf16 path: native-dtype rescale, f32-accumulated pool.
    xb = x.astype(jnp.bfloat16)
    out_b = jax.block_until_ready(eca_forward(xb, conv_w))
    ref_b = eca_reference(xb, conv_w)
    assert out_b.dtype == jnp.bfloat16
    assert jnp.allclose(out_b.astype(jnp.float32), ref_b.astype(jnp.float32),
                        atol=1e-1, rtol=1e-1), "mismatch (bf16)"

    # --- case 2: small spatial map (7x7), channel=128 -> k=5, channels-last ---
    C2, H2, W2 = 128, 7, 7
    k_s = _eca_k(C2)                                                # 5
    x_s = jax.random.normal(k3, (N, C2, H2, W2), dtype=jnp.float32)
    conv_w_s = jax.random.normal(k4, (1, 1, k_s), dtype=jnp.float32) * 0.5
    out_s = jax.block_until_ready(eca_forward(x_s, conv_w_s))
    ref_s = eca_reference(x_s, conv_w_s)
    assert jnp.allclose(out_s, ref_s, atol=2e-3, rtol=2e-3), "mismatch (7x7 / channels-last)"

    print("KERNEL_OK")
</pallas_src>

<mosaic_0001>
module attributes {stable_mosaic.version = 11 : i64} {
  func.func @_eca_kernel(%arg0: i32, %arg1: memref<16x16xf32, #tpu.memory_space<vmem>>, %arg2: memref<2x16x256xf32, #tpu.memory_space<vmem>>, %arg3: memref<2x16x256xf32, #tpu.memory_space<vmem>>) attributes {dimension_semantics = [#tpu.dimension_semantics<parallel>], iteration_bounds = array<i64: 1>, scalar_prefetch = 0 : i64, scratch_operands = 0 : i64, tpu.core_type = #tpu.core_type<tc>, window_params = [{pipeline_mode = #tpu.pipeline_mode<synchronous>, transform_indices = @transform_0, window_bounds = array<i64: 16, 16>}, {transform_indices = @transform_1, window_bounds = array<i64: 2, 16, 256>}, {transform_indices = @transform_2, window_bounds = array<i64: 2, 16, 256>}]} {
    %c0 = arith.constant 0 : index
    %c0_0 = arith.constant 0 : index
    %c0_1 = arith.constant 0 : index
    %0 = vector.load %arg2[%c0, %c0_0, %c0_1] : memref<2x16x256xf32, #tpu.memory_space<vmem>>, vector<2x16x256xf32>
    %cst = arith.constant dense<0.000000e+00> : vector<2x16xf32>
    %1 = vector.multi_reduction <add>, %0, %cst [2] : vector<2x16x256xf32> to vector<2x16xf32>
    %cst_2 = arith.constant 3.906250e-03 : f32
    %2 = vector.broadcast %cst_2 : f32 to vector<2x16xf32>
    %3 = arith.mulf %1, %2 : vector<2x16xf32>
    %c0_3 = arith.constant 0 : index
    %c0_4 = arith.constant 0 : index
    %4 = vector.load %arg1[%c0_3, %c0_4] : memref<16x16xf32, #tpu.memory_space<vmem>>, vector<16x16xf32>
    %cst_5 = arith.constant dense<0.000000e+00> : vector<2x16xf32>
    %5 = tpu.matmul %3, %4, %cst_5 {dimension_numbers = #tpu.dot_dimension_numbers<[1], [0], [0], [1], [0, 0, 1, 1], [], []>} : vector<2x16xf32>, vector<16x16xf32>, vector<2x16xf32> -> vector<2x16xf32>
    %6 = arith.negf %5 : vector<2x16xf32>
    %7 = math.exp %6 : vector<2x16xf32>
    %cst_6 = arith.constant 1.000000e+00 : f32
    %8 = vector.broadcast %cst_6 : f32 to vector<2x16xf32>
    %9 = arith.addf %8, %7 : vector<2x16xf32>
    %10 = arith.divf %8, %9 : vector<2x16xf32>
    %c0_7 = arith.constant 0 : index
    %c0_8 = arith.constant 0 : index
    %c0_9 = arith.constant 0 : index
    %11 = vector.load %arg2[%c0_7, %c0_8, %c0_9] : memref<2x16x256xf32, #tpu.memory_space<vmem>>, vector<2x16x256xf32>
    %12 = vector.shape_cast %10 : vector<2x16xf32> to vector<2x16x1xf32>
    %13 = vector.broadcast %12 : vector<2x16x1xf32> to vector<2x16x256xf32>
    %14 = arith.mulf %11, %13 : vector<2x16x256xf32>
    %c0_10 = arith.constant 0 : index
    %c0_11 = arith.constant 0 : index
    %c0_12 = arith.constant 0 : index
    %15 = vector.load %arg3[%c0_10, %c0_11, %c0_12] : memref<2x16x256xf32, #tpu.memory_space<vmem>>, vector<2x16x256xf32>
    tpu.vector_store %arg3[%c0_10, %c0_11, %c0_12], %14 {strides = array<i32>} : memref<2x16x256xf32, #tpu.memory_space<vmem>>, vector<2x16x256xf32>,
    return
  }
  func.func @transform_0(%arg0: i32) -> (i32, i32) {
    %c0_i32 = arith.constant 0 : i32
    %c0_i32_0 = arith.constant 0 : i32
    %c0_i32_1 = arith.constant 0 : i32
    return %c0_i32, %c0_i32_0 : i32, i32
  }
  func.func @transform_1(%arg0: i32) -> (i32, i32, i32) {
    %c0_i32 = arith.constant 0 : i32
    %c0_i32_0 = arith.constant 0 : i32
    %c0_i32_1 = arith.constant 0 : i32
    return %arg0, %c0_i32, %c0_i32_0 : i32, i32, i32
  }
  func.func @transform_2(%arg0: i32) -> (i32, i32, i32) {
    %c0_i32 = arith.constant 0 : i32
    %c0_i32_0 = arith.constant 0 : i32
    %c0_i32_1 = arith.constant 0 : i32
    return %arg0, %c0_i32, %c0_i32_0 : i32, i32, i32
  }
}

</mosaic_0001>

<llo_original>
// kernel: tpu_custom_call.1
$region0: #{tpu_custom_call.1}
  #allocation0 [shape = 'u32[]', space=smem, size = 0x4, offset = 0x4, fixed_abs, tag = 'smem constant byte address 0x4 - core index']
  #allocation1 [shape = 'u32[144,128]{1,0:T(1,128)}', space=vmem, size = 0x12000, scoped, tag = 'internal scratch']
  %s0 = inlined_call_operand.hbm [shape: f32[16,16], index: 0, kind: input, shape index: {}]
  %s1 = inlined_call_operand.hbm [shape: f32[2,16,256], index: 1, kind: input, shape index: {}]
  %s2 = inlined_call_operand.hbm [shape: f32[2,16,256], index: 2, kind: output, shape index: {}]
  %s3 = sld [smem:[#allocation0]]
  $region26: #{tpu_custom_call.1} parent=0
    _
  %s5 = ssub.s32 1, %s3
  %s6 = scalar_select 0, %s5, %s3
  $region1: #{tpu_custom_call.1} parent=0
    #allocation2 [shape = 'u8[8192]{0}', space=vmem, size = 0x2000, scoped, tag = 'input window, operand 0, single buffered']
    #allocation3 [shape = 's32[1]{0}', space=sflag, size = 0x4, scoped, tag = 'scoped memory for tpu_custom_call.1']
    #allocation4 [shape = 's32[1]{0}', space=sflag, size = 0x4, scoped, tag = 'scoped memory for tpu_custom_call.1']
    #allocation5 [shape = 'u8[32768]{0}', space=vmem, size = 0x8000, scoped, tag = 'input window, operand 1, single buffered']
    #allocation6 [shape = 's32[1]{0}', space=sflag, size = 0x4, scoped, tag = 'scoped memory for tpu_custom_call.1']
    #allocation7 [shape = 'u8[32768]{0}', space=vmem, size = 0x8000, scoped, tag = 'output window, operand 0, single buffered']
    %7 = vsyncpa [#allocation3], 0
    %8 = vsyncpa [#allocation6], 0
    %9 = vsyncpa [#allocation4], 0
    // Predicated region
    $region2: #{tpu_custom_call.1} parent=1 // pred_check
      _
    $region3: #{tpu_custom_call.1} parent=1 // pred_check_branch
      %11 = sbr.rel (0) target = $region5
    $region4: #{tpu_custom_call.1} parent=1 // pred_region
      %s13 = ssub.s32 256, 256
      %14 = vsyncadd [#allocation3], %s13
      %s15 = sshll.u32 [#allocation2], 4
      %s16 = int_to_ptr.vmem [resolvable:$true] %s15
      %21 = dma.hbm_to_vmem [thread:$0]  %s0, 256, %s16, [#allocation3], 128, 128, 8
    $region5: #{tpu_custom_call.1} parent=1 // pred_fallthru
      _
    // Predicated region
    $region6: #{tpu_custom_call.1} parent=1 // pred_check
      _
    $region7: #{tpu_custom_call.1} parent=1 // pred_check_branch
      %23 = sbr.rel (0) target = $region9
    $region8: #{tpu_custom_call.1} parent=1 // pred_region
      %s25 = ssub.s32 1024, 1024
      %26 = vsyncadd [#allocation6], %s25
      %s27 = sshll.u32 [#allocation5], 4
      %s28 = int_to_ptr.vmem [resolvable:$true] %s27
      %33 = dma.hbm_to_vmem [thread:$0]  %s1, 1024, %s28, [#allocation6], 256, 256, 16
    $region9: #{tpu_custom_call.1} parent=1 // pred_fallthru
      _
    // Predicated region
    $region10: #{tpu_custom_call.1} parent=1 // pred_check
      _
    $region11: #{tpu_custom_call.1} parent=1 // pred_check_branch
      %35 = sbr.rel (0) target = $region13
    $region12: #{tpu_custom_call.1} parent=1 // pred_region
      %36 = dma.done [#allocation3], 256
    $region13: #{tpu_custom_call.1} parent=1 // pred_fallthru
      _
    // Predicated region
    $region14: #{tpu_custom_call.1} parent=1 // pred_check
      _
    $region15: #{tpu_custom_call.1} parent=1 // pred_check_branch
      %38 = sbr.rel (0) target = $region17
    $region16: #{tpu_custom_call.1} parent=1 // pred_region
      %39 = dma.done [#allocation6], 1024
    $region17: #{tpu_custom_call.1} parent=1 // pred_fallthru
      _
    %v40 = vld [vmem:[#allocation5] sm:$0xff]
    %v41 = vld [vmem:[#allocation5 + $0x8] sm:$0xff]
    %v42 = vld [vmem:[#allocation5 + $0x10] sm:$0xff]
    %v43 = vld [vmem:[#allocation5 + $0x18] sm:$0xff]
    %v44 = vld [vmem:[#allocation5 + $0x20] sm:$0xff]
    %v45 = vld [vmem:[#allocation5 + $0x28] sm:$0xff]
    %v46 = vld [vmem:[#allocation5 + $0x30] sm:$0xff]
    %v47 = vld [vmem:[#allocation5 + $0x38] sm:$0xff]
    %v48 = vadd.f32 %v40, %v41
    %49 = vadd.xlane.f32.xlu0 %v48
    %v50 = vpop.xlane.xlu0 %49
    %v51 = vadd.f32 %v42, %v43
    %52 = vadd.xlane.f32.xlu0 %v51
    %v53 = vpop.xlane.xlu0 %52
    %v54 = vadd.f32 %v44, %v45
    %55 = vadd.xlane.f32.xlu0 %v54
    %v56 = vpop.xlane.xlu0 %55
    %v57 = vadd.f32 %v46, %v47
    %58 = vadd.xlane.f32.xlu0 %v57
    %v59 = vpop.xlane.xlu0 %58
    %v60 = vmul.f32 %v50, 0.00390625
    %v61 = vmul.f32 %v53, 0.00390625
    %v62 = vmul.f32 %v56, 0.00390625
    %v63 = vmul.f32 %v59, 0.00390625
    %v64 = vld [vmem:[#allocation2] sm:$0xff]
    %v65 = vld [vmem:[#allocation2 + $0x8] sm:$0xff]
    %v70 = vlaneseq
    %v71 = vand.u32 %v70, 127
    %v72 = vlaneseq
    %v73 = vshrl.u32 %v72, 7
    %v74 = vsub.s32 %v71, %v73
    %v75 = vrot.slane %v60, %v74
    %v76 = vadd.s32 %v71, 4294967288
    %v77 = vlaneseq
    %v78 = vshrl.u32 %v77, 7
    %v79 = vsub.s32 %v76, %v78
    %v80 = vrot.slane %v61, %v79
    %vm81 = vcmask 130112
    %v82 = vsel %vm81, %v80, %v75
    %v83 = vlaneseq
    %v84 = vshrl.u32 %v83, 7
    %v85 = vsub.s32 %v71, %v84
    %v86 = vrot.slane %v62, %v85
    %v87 = vlaneseq
    %v88 = vshrl.u32 %v87, 7
    %v89 = vsub.s32 %v76, %v88
    %v90 = vrot.slane %v63, %v89
    %v91 = vsel %vm81, %v90, %v86
    %vm92 = vcmask 1041409
    %v93 = vsel %vm92, %v91, %v82
    %vm94 = vcmask 130048
    %v95 = vsel %vm94, %v93, 0
    %97 = vmatprep.subr.mxu0 0.0
    %98 = vmatpush1.msra.mxu0 0.0
    %99 = vmatprep.subr.mxu0 0.0
    %100 = vmatpush1.msra.mxu0 0.0
    %101 = vmatprep.subr.mxu0 0.0
    %102 = vmatpush1.msra.mxu0 0.0
    %103 = vmatprep.subr.mxu0 0.0
    %104 = vmatpush1.msra.mxu0 0.0
    %105 = vmatprep.subr.mxu0 0.0
    %106 = vmatpush1.msra.mxu0 0.0
    %107 = vmatprep.subr.mxu0 0.0
    %108 = vmatpush1.msra.mxu0 0.0
    %109 = vmatprep.subr.mxu0 0.0
    %110 = vmatpush1.msra.mxu0 0.0
    %111 = vmatprep.subr.mxu0 0.0
    %112 = vmatpush1.msra.mxu0 0.0
    %113 = vmatprep.subr.mxu0 0.0
    %114 = vmatpush1.msra.mxu0 0.0
    %115 = vmatprep.subr.mxu0 0.0
    %116 = vmatpush1.msra.mxu0 0.0
    %117 = vmatprep.subr.mxu0 0.0
    %118 = vmatpush1.msra.mxu0 0.0
    %119 = vmatprep.subr.mxu0 0.0
    %120 = vmatpush1.msra.mxu0 0.0
    %121 = vmatprep.subr.mxu0 0.0
    %122 = vmatpush1.msra.mxu0 0.0
    %123 = vmatprep.subr.mxu0 0.0
    %124 = vmatpush1.msra.mxu0 0.0
    %125 = vmatprep.subr.mxu0 0.0
    %126 = vmatpush1.msra.mxu0 %v65
    %127 = vmatprep.subr.mxu0 0.0
    %128 = vmatpush1.msra.mxu0 %v64
    %129 = vmatprep.subr.mxu0 0.0
    %130 = vmatpush2.msra.mxu0 0.0
    %131 = vmatprep.subr.mxu0 0.0
    %132 = vmatpush2.msra.mxu0 0.0
    %133 = vmatprep.subr.mxu0 0.0
    %134 = vmatpush2.msra.mxu0 0.0
    %135 = vmatprep.subr.mxu0 0.0
    %136 = vmatpush2.msra.mxu0 0.0
    %137 = vmatprep.subr.mxu0 0.0
    %138 = vmatpush2.msra.mxu0 0.0
    %139 = vmatprep.subr.mxu0 0.0
    %140 = vmatpush2.msra.mxu0 0.0
    %141 = vmatprep.subr.mxu0 0.0
    %142 = vmatpush2.msra.mxu0 0.0
    %143 = vmatprep.subr.mxu0 0.0
    %144 = vmatpush2.msra.mxu0 0.0
    %145 = vmatprep.subr.mxu0 0.0
    %146 = vmatpush2.msra.mxu0 0.0
    %147 = vmatprep.subr.mxu0 0.0
    %148 = vmatpush2.msra.mxu0 0.0
    %149 = vmatprep.subr.mxu0 0.0
    %150 = vmatpush2.msra.mxu0 0.0
    %151 = vmatprep.subr.mxu0 0.0
    %152 = vmatpush2.msra.mxu0 0.0
    %153 = vmatprep.subr.mxu0 0.0
    %154 = vmatpush2.msra.mxu0 0.0
    %155 = vmatprep.subr.mxu0 0.0
    %156 = vmatpush2.msra.mxu0 0.0
    %157 = vmatprep.subr.mxu0 0.0
    %158 = vmatpush2.msra.mxu0 0.0
    %159 = vmatprep.subr.mxu0 0.0
    %160 = vmatpush2.msra.mxu0 0.0
    %161 = vmatprep.mubr.f32.mxu0 0.0
    %162 = vmatmul.mubr.f32.gmra.mxu0 %v95
    %v163 = vpop.f32.mrf.mxu0
    %v164 = vadd.f32 0.0, %v163
    %v165 = vpop.f32.mrf.mxu0
    %166 = vdwg.mxu0
    %v167 = vxor.u32 %v164, 2147483648
    %v168 = vmul.f32 %v167, 1.442695
    %v169 = vpow.pop %v168
    %v170 = vadd.f32 %v169, 1.0
    %v171 = vrcp.pop %v170
    %v172 = vmul.f32 1.0, %v171
    %v173 = vlaneseq
    %v174 = vshrl.u32 %v173, 7
    %v175 = vsub.s32 0, %v174
    %v176 = vrot.slane %v172, %v175
    %178 = vbcast.lane.b32.xlu0 %v176, 256
    %v179 = vpop.permute.xlu0 %178
    %s181 = sor.u32 256, 8
    %182 = vbcast.lane.b32.xlu0 %v176, %s181
    %v183 = vpop.permute.xlu0 %182
    %v184 = vlaneseq
    %v185 = vshrl.u32 %v184, 7
    %v186 = vsub.s32 1, %v185
    %v187 = vrot.slane %v172, %v186
    %189 = vbcast.lane.b32.xlu0 %v187, 256
    %v190 = vpop.permute.xlu0 %189
    %s192 = sor.u32 256, 8
    %193 = vbcast.lane.b32.xlu0 %v187, %s192
    %v194 = vpop.permute.xlu0 %193
    %v195 = vmul.f32 %v40, %v179
    %v196 = vmul.f32 %v41, %v179
    %v197 = vmul.f32 %v42, %v183
    %v198 = vmul.f32 %v43, %v183
    %v199 = vmul.f32 %v44, %v190
    %v200 = vmul.f32 %v45, %v190
    %v201 = vmul.f32 %v46, %v194
    %v202 = vmul.f32 %v47, %v194
    %203 = vst [vmem:[#allocation7] sm:$0xff] %v195
    %204 = vst [vmem:[#allocation7 + $0x8] sm:$0xff] %v196
    %205 = vst [vmem:[#allocation7 + $0x10] sm:$0xff] %v197
    %206 = vst [vmem:[#allocation7 + $0x18] sm:$0xff] %v198
    %207 = vst [vmem:[#allocation7 + $0x20] sm:$0xff] %v199
    %208 = vst [vmem:[#allocation7 + $0x28] sm:$0xff] %v200
    %209 = vst [vmem:[#allocation7 + $0x30] sm:$0xff] %v201
    %210 = vst [vmem:[#allocation7 + $0x38] sm:$0xff] %v202
    // Predicated region
    $region18: #{tpu_custom_call.1} parent=1 // pred_check
      _
    $region19: #{tpu_custom_call.1} parent=1 // pred_check_branch
      %212 = sbr.rel (0) target = $region21
    $region20: #{tpu_custom_call.1} parent=1 // pred_region
      %s214 = ssub.s32 1024, 1024
      %215 = vsyncadd [#allocation4], %s214
      %s216 = sshll.u32 [#allocation7], 4
      %s217 = int_to_ptr.vmem [resolvable:$true] %s216
      %222 = dma.vmem_to_hbm [thread:$0]  %s217, 1024, %s2, [#allocation4], 256, 256, 16
    $region21: #{tpu_custom_call.1} parent=1 // pred_fallthru
      _
    // Predicated region
    $region22: #{tpu_custom_call.1} parent=1 // pred_check
      _
    $region23: #{tpu_custom_call.1} parent=1 // pred_check_branch
      %224 = sbr.rel (0) target = $region25
    $region24: #{tpu_custom_call.1} parent=1 // pred_region
      %225 = dma.done [#allocation4], 1024
    $region25: #{tpu_custom_call.1} parent=1 // pred_fallthru
      _
    %226 = vsyncpa [#allocation3], 1
    %227 = vsyncpa [#allocation6], 1
    %228 = vsyncpa [#allocation4], 1

</llo_original>
